<compile_context>
chip_gen: v7x
topology: tpu7x:2x2x1
jax: 0.10.0
libtpu: 0.0.40
codegen_flags: <defaults>
</compile_context>

<pallas_src>
import jax
import jax.numpy as jnp
from jax.experimental import pallas as pl
from jax.experimental.pallas import tpu as pltpu


# ---------------------------------------------------------------------------
# Kernel: one broadcast multiply per output block.
#   a_ref : (1, ta, 1, m)      row-block of the inner factor A
#   b_ref : (s_b, 1, s_b, 1)   outer factor B (VMEM-resident)
#   o_ref : (s_b, ta, s_b, m)  == s_b contiguous runs of ta*H output elements
# ---------------------------------------------------------------------------
def _kron_expand_kernel(a_ref, b_ref, o_ref):
    o_ref[...] = (b_ref[...] * a_ref[...]).astype(o_ref.dtype)


def _int_log(base: int, value: int) -> int:
    """Integer log_base(value); raises if value is not an exact power."""
    if base < 2:
        raise ValueError("unitary_size must be >= 2")
    n, v = 0, 1
    while v < value:
        v *= base
        n += 1
    if v != value:
        raise ValueError(f"{value} is not a power of {base}")
    return n


def _kron_power(x: jax.Array, n: int) -> jax.Array:
    """n-fold Kronecker power (n == 0 -> [[1.]]). Tiny; plain XLA."""
    out = jnp.ones((1, 1), dtype=x.dtype)
    for _ in range(n):
        out = jnp.kron(out, x)
    return out


def _ceil_to(x: int, n: int) -> int:
    return -(-x // n) * n


def _vmem_capacity_bytes() -> int:
    """Physical VMEM per core; conservative (v7x = 64 MiB) fallback."""
    try:
        cap = getattr(pltpu.get_tpu_info(), "vmem_capacity_bytes", None)
        if cap:
            return int(cap)
    except Exception:
        pass
    return 64 * 2**20


def _choose_split(s: int, num_repeat: int, H: int, itemsize: int,
                  block_cap: int):
    """Pick kb: B = u^{(x)kb} (outer, s_b x s_b), A = u^{(x)(nr-kb)} (m x m)."""
    cands = []
    for kb in range(1, num_repeat + 1):
        s_b = s ** kb
        m = H // s_b
        min_block = s_b * min(m, 8) * H * itemsize
        cands.append((kb, s_b, m, min_block))

    pool = [c for c in cands if c[3] <= block_cap]
    if not pool:                               # absurdly large H: smallest split
        pool = [cands[0]]
    lane_full = [c for c in pool if c[2] >= 128]   # full 128-lane last dim
    if lane_full:
        pool = lane_full
    big = [c for c in pool if c[1] >= 8]           # A-read overhead <= 1/64
    if big:
        pool = big

    def score(c):
        _, s_b, m, _ = c
        sub_eff = s_b / _ceil_to(s_b, 8)                       # sublane packing
        lane_eff = min(m, 128) / min(_ceil_to(m, 128), 128)    # lane packing
        return (sub_eff * lane_eff, m)

    kb, s_b, m, _ = max(pool, key=score)
    return kb, s_b, m


def _choose_ta(s_b: int, m: int, H: int, itemsize: int, block_cap: int) -> int:
    """Largest divisor of m whose (s_b, ta, s_b, m) block fits the budget and
    leaves >= 4 grid steps (when m allows) for megacore pipelining."""
    if m <= 8:
        return m
    cap = block_cap // (s_b * H * itemsize)
    if m >= 32:
        cap = min(cap, m // 4)          # >= 4 grid steps -> >= 2 per v7x core
    cap = max(1, min(cap, m))
    best, i = 1, 1
    while i * i <= m:
        if m % i == 0:
            for d in (i, m // i):
                if best < d <= cap:
                    best = d
        i += 1
    return best


def unitary_riemann_forward(u: jax.Array, H_size: int) -> jax.Array:
    """Pallas equivalent of UnitaryRiemann.forward().

    u: (unitary_size, unitary_size) float32 unitary parameter.
    Returns the (H_size, H_size) num_repeat-fold Kronecker power of u.
    """
    s = u.shape[0]
    assert u.shape == (s, s), "u must be square"
    num_repeat = _int_log(s, H_size)
    dtype = u.dtype
    itemsize = jnp.dtype(dtype).itemsize

    # Generation-aware VMEM budget: headroom under v7x's 64 MiB, no artificial
    # clamp on v5e/v6e's 128 MiB.
    vmem_cap = _vmem_capacity_bytes()
    usable_vmem = (vmem_cap * 3) // 4
    block_cap = max(2 * 2**20, min(8 * 2**20, usable_vmem // 5))

    kb, s_b, m = _choose_split(s, num_repeat, H_size, itemsize, block_cap)
    ta = _choose_ta(s_b, m, H_size, itemsize, block_cap)
    grid_rows = m // ta

    # Tiny XLA prologue: the two Kronecker factors.  kron is associative, so
    # kron(B, A) == u^{(x)num_repeat}.
    b_mat = _kron_power(u, kb)                    # (s_b, s_b)  outer factor
    a_mat = _kron_power(u, num_repeat - kb)       # (m,  m)     inner factor
    # Pre-insert broadcast axes so the kernel body needs no reshape/relayout.
    a_4d = a_mat.reshape(1, m, 1, m)
    b_4d = b_mat.reshape(s_b, 1, s_b, 1)

    # VMEM accounting with (8,128) padding: double-buffered output blocks plus
    # (conservatively) materialized broadcast temporaries and the inputs.
    out_blk = s_b * ta * _ceil_to(s_b, 8) * _ceil_to(m, 128) * itemsize
    a_blk = ta * 8 * _ceil_to(m, 128) * itemsize
    b_blk = s_b * _ceil_to(s_b, 8) * 128 * itemsize
    need = 4 * out_blk + 2 * a_blk + 2 * b_blk + 8 * 2**20
    vmem_limit = int(min(max(need, 32 * 2**20), usable_vmem))

    out4 = pl.pallas_call(
        _kron_expand_kernel,
        out_shape=jax.ShapeDtypeStruct((s_b, m, s_b, m), dtype),
        grid=(grid_rows,),
        in_specs=[
            pl.BlockSpec((1, ta, 1, m), lambda i: (0, i, 0, 0)),     # A rows
            pl.BlockSpec((s_b, 1, s_b, 1), lambda i: (0, 0, 0, 0)),  # B resident
        ],
        out_specs=pl.BlockSpec((s_b, ta, s_b, m), lambda i: (0, i, 0, 0)),
        compiler_params=pltpu.CompilerParams(
            dimension_semantics=("parallel",),
            vmem_limit_bytes=vmem_limit,
        ),
        cost_estimate=pl.CostEstimate(
            flops=H_size * H_size,
            bytes_accessed=itemsize * (H_size * H_size + m * m + s_b * s_b),
            transcendentals=0,
        ),
    )(a_4d, b_4d)

    # Row-major (s_b, m, s_b, m) is exactly the (H, H) Kronecker power:
    # row p*m + a, column q*m + c.  The reshape is free metadata.
    return out4.reshape(H_size, H_size)


def make_random_unitary(key: jax.Array, size: int) -> jax.Array:
    """Deterministic Haar-ish unitary: QR of a Gaussian matrix (real branch)."""
    g = jax.random.normal(key, (size, size), dtype=jnp.float32)
    q, _ = jnp.linalg.qr(g)
    return q.astype(jnp.float32)


if __name__ == "__main__":
    key = jax.random.PRNGKey(0)
    fwd = jax.jit(unitary_riemann_forward, static_argnames=("H_size",))

    # Small configs covering: single full-array block, an odd base (non-power-
    # of-two packing), a multi-step lane-dense grid, and a tiled 4-step grid.
    for unitary_size, H_size in [(4, 64), (3, 243), (2, 256), (4, 1024)]:
        u0 = make_random_unitary(key, unitary_size)   # the single nn.Parameter

        out = jax.block_until_ready(fwd(u0, H_size=H_size))

        # Pure-JAX reference of the forward pass (torch.kron semantics).
        num_repeat = _int_log(unitary_size, H_size)
        ref = u0
        for _ in range(num_repeat - 1):
            ref = jnp.kron(ref, u0)
        ref = jax.block_until_ready(ref)

        assert out.shape == (H_size, H_size)
        assert jnp.allclose(out, ref, atol=1e-5, rtol=1e-5), (
            f"mismatch vs jnp.kron reference for base={unitary_size}, H={H_size}")

    print("KERNEL_OK")
</pallas_src>

<mosaic_0001>
module attributes {stable_mosaic.version = 11 : i64} {
  func.func @_kron_expand_kernel(%arg0: i32, %arg1: memref<1x4x1x4xf32, #tpu.memory_space<vmem>>, %arg2: memref<16x1x16x1xf32, #tpu.memory_space<vmem>>, %arg3: memref<16x4x16x4xf32, #tpu.memory_space<vmem>>) attributes {dimension_semantics = [#tpu.dimension_semantics<parallel>], iteration_bounds = array<i64: 1>, scalar_prefetch = 0 : i64, scratch_operands = 0 : i64, tpu.core_type = #tpu.core_type<tc>, window_params = [{transform_indices = @transform_0, window_bounds = array<i64: 1, 4, 1, 4>}, {pipeline_mode = #tpu.pipeline_mode<synchronous>, transform_indices = @transform_1, window_bounds = array<i64: 16, 1, 16, 1>}, {transform_indices = @transform_2, window_bounds = array<i64: 16, 4, 16, 4>}]} {
    %c0 = arith.constant 0 : index
    %c0_0 = arith.constant 0 : index
    %c0_1 = arith.constant 0 : index
    %c0_2 = arith.constant 0 : index
    %0 = vector.load %arg2[%c0, %c0_0, %c0_1, %c0_2] : memref<16x1x16x1xf32, #tpu.memory_space<vmem>>, vector<16x1x16x1xf32>
    %c0_3 = arith.constant 0 : index
    %c0_4 = arith.constant 0 : index
    %c0_5 = arith.constant 0 : index
    %c0_6 = arith.constant 0 : index
    %1 = vector.load %arg1[%c0_3, %c0_4, %c0_5, %c0_6] : memref<1x4x1x4xf32, #tpu.memory_space<vmem>>, vector<1x4x1x4xf32>
    %2 = vector.broadcast %0 : vector<16x1x16x1xf32> to vector<16x4x16x4xf32>
    %3 = vector.broadcast %1 : vector<1x4x1x4xf32> to vector<16x4x16x4xf32>
    %4 = arith.mulf %2, %3 : vector<16x4x16x4xf32>
    %c0_7 = arith.constant 0 : index
    %c0_8 = arith.constant 0 : index
    %c0_9 = arith.constant 0 : index
    %c0_10 = arith.constant 0 : index
    %5 = vector.load %arg3[%c0_7, %c0_8, %c0_9, %c0_10] : memref<16x4x16x4xf32, #tpu.memory_space<vmem>>, vector<16x4x16x4xf32>
    tpu.vector_store %arg3[%c0_7, %c0_8, %c0_9, %c0_10], %4 {strides = array<i32>} : memref<16x4x16x4xf32, #tpu.memory_space<vmem>>, vector<16x4x16x4xf32>,
    return
  }
  func.func @transform_0(%arg0: i32) -> (i32, i32, i32, i32) {
    %c0_i32 = arith.constant 0 : i32
    %c0_i32_0 = arith.constant 0 : i32
    %c0_i32_1 = arith.constant 0 : i32
    %c0_i32_2 = arith.constant 0 : i32
    return %c0_i32, %arg0, %c0_i32_0, %c0_i32_1 : i32, i32, i32, i32
  }
  func.func @transform_1(%arg0: i32) -> (i32, i32, i32, i32) {
    %c0_i32 = arith.constant 0 : i32
    %c0_i32_0 = arith.constant 0 : i32
    %c0_i32_1 = arith.constant 0 : i32
    %c0_i32_2 = arith.constant 0 : i32
    %c0_i32_3 = arith.constant 0 : i32
    return %c0_i32, %c0_i32_0, %c0_i32_1, %c0_i32_2 : i32, i32, i32, i32
  }
  func.func @transform_2(%arg0: i32) -> (i32, i32, i32, i32) {
    %c0_i32 = arith.constant 0 : i32
    %c0_i32_0 = arith.constant 0 : i32
    %c0_i32_1 = arith.constant 0 : i32
    %c0_i32_2 = arith.constant 0 : i32
    return %c0_i32, %arg0, %c0_i32_0, %c0_i32_1 : i32, i32, i32, i32
  }
}

</mosaic_0001>

<llo_original>
// kernel: unitary_riemann_forward.1
$region0: #{unitary_riemann_forward.1}
  #allocation0 [shape = 'u32[]', space=smem, size = 0x4, offset = 0x4, fixed_abs, tag = 'smem constant byte address 0x4 - core index']
  #allocation1 [shape = 'u32[144,128]{1,0:T(1,128)}', space=vmem, size = 0x12000, scoped, tag = 'internal scratch']
  %s0 = inlined_call_operand.vmem [shape: f32[1,4,1,4], index: 0, kind: input, shape index: {}]
  %s1 = inlined_call_operand.vmem [shape: f32[16,1,16,1], index: 1, kind: input, shape index: {}]
  %s2 = inlined_call_operand.vmem [shape: f32[16,4,16,4], index: 2, kind: output, shape index: {}]
  %s3 = sld [smem:[#allocation0]]
  $region18: #{unitary_riemann_forward.1} parent=0
    _
  %s5 = ssub.s32 1, %s3
  %s6 = scalar_select 0, %s5, %s3
  // Predicated region
  $region2: #{unitary_riemann_forward.1} parent=0 // pred_check
    _
  $region3: #{unitary_riemann_forward.1} parent=0 // pred_check_branch
    %8 = sbr.rel (0) target = $region5
  $region4: #{unitary_riemann_forward.1} parent=0 // pred_region
    _
  $region5: #{unitary_riemann_forward.1} parent=0 // pred_fallthru
    _
  // Predicated region
  $region6: #{unitary_riemann_forward.1} parent=0 // pred_check
    _
  $region7: #{unitary_riemann_forward.1} parent=0 // pred_check_branch
    %10 = sbr.rel (0) target = $region9
  $region8: #{unitary_riemann_forward.1} parent=0 // pred_region
    _
  $region9: #{unitary_riemann_forward.1} parent=0 // pred_fallthru
    _
  %v11 = vld [vmem:[%s1] sm:$0xff]
  %v12 = vld [vmem:[%s1 + $0x8] sm:$0xff]
  %v13 = vld [vmem:[%s1 + $0x10] sm:$0xff]
  %v14 = vld [vmem:[%s1 + $0x18] sm:$0xff]
  %v15 = vld [vmem:[%s1 + $0x20] sm:$0xff]
  %v16 = vld [vmem:[%s1 + $0x28] sm:$0xff]
  %v17 = vld [vmem:[%s1 + $0x30] sm:$0xff]
  %v18 = vld [vmem:[%s1 + $0x38] sm:$0xff]
  %v19 = vld [vmem:[%s1 + $0x40] sm:$0xff]
  %v20 = vld [vmem:[%s1 + $0x48] sm:$0xff]
  %v21 = vld [vmem:[%s1 + $0x50] sm:$0xff]
  %v22 = vld [vmem:[%s1 + $0x58] sm:$0xff]
  %v23 = vld [vmem:[%s1 + $0x60] sm:$0xff]
  %v24 = vld [vmem:[%s1 + $0x68] sm:$0xff]
  %v25 = vld [vmem:[%s1 + $0x70] sm:$0xff]
  %v26 = vld [vmem:[%s1 + $0x78] sm:$0xff]
  %v27 = vld [vmem:[%s1 + $0x80] sm:$0xff]
  %v28 = vld [vmem:[%s1 + $0x88] sm:$0xff]
  %v29 = vld [vmem:[%s1 + $0x90] sm:$0xff]
  %v30 = vld [vmem:[%s1 + $0x98] sm:$0xff]
  %v31 = vld [vmem:[%s1 + $0xa0] sm:$0xff]
  %v32 = vld [vmem:[%s1 + $0xa8] sm:$0xff]
  %v33 = vld [vmem:[%s1 + $0xb0] sm:$0xff]
  %v34 = vld [vmem:[%s1 + $0xb8] sm:$0xff]
  %v35 = vld [vmem:[%s1 + $0xc0] sm:$0xff]
  %v36 = vld [vmem:[%s1 + $0xc8] sm:$0xff]
  %v37 = vld [vmem:[%s1 + $0xd0] sm:$0xff]
  %v38 = vld [vmem:[%s1 + $0xd8] sm:$0xff]
  %v39 = vld [vmem:[%s1 + $0xe0] sm:$0xff]
  %v40 = vld [vmem:[%s1 + $0xe8] sm:$0xff]
  %v41 = vld [vmem:[%s1 + $0xf0] sm:$0xff]
  %v42 = vld [vmem:[%s1 + $0xf8] sm:$0xff]
  %v43 = vld [vmem:[%s0] sm:$0x1]
  %v44 = vld [vmem:[%s0 + $0x1] sm:$0x1]
  %v45 = vld [vmem:[%s0 + $0x2] sm:$0x1]
  %v46 = vld [vmem:[%s0 + $0x3] sm:$0x1]
  %48 = vset.pattern.permute.xlu0 0
  %49 = vperm.xlu0 %48, %v11
  %v50 = vpop.permute.xlu0 %49
  %53 = vset.pattern.permute.xlu0 0
  %54 = vperm.xlu0 %53, %v12
  %v55 = vpop.permute.xlu0 %54
  %58 = vset.pattern.permute.xlu0 0
  %59 = vperm.xlu0 %58, %v13
  %v60 = vpop.permute.xlu0 %59
  %63 = vset.pattern.permute.xlu0 0
  %64 = vperm.xlu0 %63, %v14
  %v65 = vpop.permute.xlu0 %64
  %68 = vset.pattern.permute.xlu0 0
  %69 = vperm.xlu0 %68, %v15
  %v70 = vpop.permute.xlu0 %69
  %73 = vset.pattern.permute.xlu0 0
  %74 = vperm.xlu0 %73, %v16
  %v75 = vpop.permute.xlu0 %74
  %78 = vset.pattern.permute.xlu0 0
  %79 = vperm.xlu0 %78, %v17
  %v80 = vpop.permute.xlu0 %79
  %83 = vset.pattern.permute.xlu0 0
  %84 = vperm.xlu0 %83, %v18
  %v85 = vpop.permute.xlu0 %84
  %88 = vset.pattern.permute.xlu0 0
  %89 = vperm.xlu0 %88, %v19
  %v90 = vpop.permute.xlu0 %89
  %93 = vset.pattern.permute.xlu0 0
  %94 = vperm.xlu0 %93, %v20
  %v95 = vpop.permute.xlu0 %94
  %98 = vset.pattern.permute.xlu0 0
  %99 = vperm.xlu0 %98, %v21
  %v100 = vpop.permute.xlu0 %99
  %103 = vset.pattern.permute.xlu0 0
  %104 = vperm.xlu0 %103, %v22
  %v105 = vpop.permute.xlu0 %104
  %108 = vset.pattern.permute.xlu0 0
  %109 = vperm.xlu0 %108, %v23
  %v110 = vpop.permute.xlu0 %109
  %113 = vset.pattern.permute.xlu0 0
  %114 = vperm.xlu0 %113, %v24
  %v115 = vpop.permute.xlu0 %114
  %118 = vset.pattern.permute.xlu0 0
  %119 = vperm.xlu0 %118, %v25
  %v120 = vpop.permute.xlu0 %119
  %123 = vset.pattern.permute.xlu0 0
  %124 = vperm.xlu0 %123, %v26
  %v125 = vpop.permute.xlu0 %124
  %128 = vset.pattern.permute.xlu0 0
  %129 = vperm.xlu0 %128, %v27
  %v130 = vpop.permute.xlu0 %129
  %133 = vset.pattern.permute.xlu0 0
  %134 = vperm.xlu0 %133, %v28
  %v135 = vpop.permute.xlu0 %134
  %138 = vset.pattern.permute.xlu0 0
  %139 = vperm.xlu0 %138, %v29
  %v140 = vpop.permute.xlu0 %139
  %143 = vset.pattern.permute.xlu0 0
  %144 = vperm.xlu0 %143, %v30
  %v145 = vpop.permute.xlu0 %144
  %148 = vset.pattern.permute.xlu0 0
  %149 = vperm.xlu0 %148, %v31
  %v150 = vpop.permute.xlu0 %149
  %153 = vset.pattern.permute.xlu0 0
  %154 = vperm.xlu0 %153, %v32
  %v155 = vpop.permute.xlu0 %154
  %158 = vset.pattern.permute.xlu0 0
  %159 = vperm.xlu0 %158, %v33
  %v160 = vpop.permute.xlu0 %159
  %163 = vset.pattern.permute.xlu0 0
  %164 = vperm.xlu0 %163, %v34
  %v165 = vpop.permute.xlu0 %164
  %168 = vset.pattern.permute.xlu0 0
  %169 = vperm.xlu0 %168, %v35
  %v170 = vpop.permute.xlu0 %169
  %173 = vset.pattern.permute.xlu0 0
  %174 = vperm.xlu0 %173, %v36
  %v175 = vpop.permute.xlu0 %174
  %178 = vset.pattern.permute.xlu0 0
  %179 = vperm.xlu0 %178, %v37
  %v180 = vpop.permute.xlu0 %179
  %183 = vset.pattern.permute.xlu0 0
  %184 = vperm.xlu0 %183, %v38
  %v185 = vpop.permute.xlu0 %184
  %188 = vset.pattern.permute.xlu0 0
  %189 = vperm.xlu0 %188, %v39
  %v190 = vpop.permute.xlu0 %189
  %193 = vset.pattern.permute.xlu0 0
  %194 = vperm.xlu0 %193, %v40
  %v195 = vpop.permute.xlu0 %194
  %198 = vset.pattern.permute.xlu0 0
  %199 = vperm.xlu0 %198, %v41
  %v200 = vpop.permute.xlu0 %199
  %203 = vset.pattern.permute.xlu0 0
  %204 = vperm.xlu0 %203, %v42
  %v205 = vpop.permute.xlu0 %204
  %v211 = vlaneseq
  %v212 = vshrl.u32 %v211, 7
  %v213 = vsub.s32 0, %v212
  %v214 = vrot.slane %v43, %v213
  %v215 = vlaneseq
  %v216 = vshrl.u32 %v215, 7
  %v217 = vsub.s32 0, %v216
  %v218 = vrot.slane %v44, %v217
  %v219 = vlaneseq
  %v220 = vshrl.u32 %v219, 7
  %v221 = vsub.s32 0, %v220
  %v222 = vrot.slane %v45, %v221
  %v223 = vlaneseq
  %v224 = vshrl.u32 %v223, 7
  %v225 = vsub.s32 0, %v224
  %v226 = vrot.slane %v46, %v225
  %v231 = vmul.f32 %v50, %v214
  %v232 = vmul.f32 %v55, %v214
  %v233 = vmul.f32 %v50, %v218
  %v234 = vmul.f32 %v55, %v218
  %v235 = vmul.f32 %v50, %v222
  %v236 = vmul.f32 %v55, %v222
  %v237 = vmul.f32 %v50, %v226
  %v238 = vmul.f32 %v55, %v226
  %v239 = vmul.f32 %v60, %v214
  %v240 = vmul.f32 %v65, %v214
  %v241 = vmul.f32 %v60, %v218
  %v242 = vmul.f32 %v65, %v218
  %v243 = vmul.f32 %v60, %v222
  %v244 = vmul.f32 %v65, %v222
  %v245 = vmul.f32 %v60, %v226
  %v246 = vmul.f32 %v65, %v226
  %v247 = vmul.f32 %v70, %v214
  %v248 = vmul.f32 %v75, %v214
  %v249 = vmul.f32 %v70, %v218
  %v250 = vmul.f32 %v75, %v218
  %v251 = vmul.f32 %v70, %v222
  %v252 = vmul.f32 %v75, %v222
  %v253 = vmul.f32 %v70, %v226
  %v254 = vmul.f32 %v75, %v226
  %v255 = vmul.f32 %v80, %v214
  %v256 = vmul.f32 %v85, %v214
  %v257 = vmul.f32 %v80, %v218
  %v258 = vmul.f32 %v85, %v218
  %v259 = vmul.f32 %v80, %v222
  %v260 = vmul.f32 %v85, %v222
  %v261 = vmul.f32 %v80, %v226
  %v262 = vmul.f32 %v85, %v226
  %v263 = vmul.f32 %v90, %v214
  %v264 = vmul.f32 %v95, %v214
  %v265 = vmul.f32 %v90, %v218
  %v266 = vmul.f32 %v95, %v218
  %v267 = vmul.f32 %v90, %v222
  %v268 = vmul.f32 %v95, %v222
  %v269 = vmul.f32 %v90, %v226
  %v270 = vmul.f32 %v95, %v226
  %v271 = vmul.f32 %v100, %v214
  %v272 = vmul.f32 %v105, %v214
  %v273 = vmul.f32 %v100, %v218
  %v274 = vmul.f32 %v105, %v218
  %v275 = vmul.f32 %v100, %v222
  %v276 = vmul.f32 %v105, %v222
  %v277 = vmul.f32 %v100, %v226
  %v278 = vmul.f32 %v105, %v226
  %v279 = vmul.f32 %v110, %v214
  %v280 = vmul.f32 %v115, %v214
  %v281 = vmul.f32 %v110, %v218
  %v282 = vmul.f32 %v115, %v218
  %v283 = vmul.f32 %v110, %v222
  %v284 = vmul.f32 %v115, %v222
  %v285 = vmul.f32 %v110, %v226
  %v286 = vmul.f32 %v115, %v226
  %v287 = vmul.f32 %v120, %v214
  %v288 = vmul.f32 %v125, %v214
  %v289 = vmul.f32 %v120, %v218
  %v290 = vmul.f32 %v125, %v218
  %v291 = vmul.f32 %v120, %v222
  %v292 = vmul.f32 %v125, %v222
  %v293 = vmul.f32 %v120, %v226
  %v294 = vmul.f32 %v125, %v226
  %v295 = vmul.f32 %v130, %v214
  %v296 = vmul.f32 %v135, %v214
  %v297 = vmul.f32 %v130, %v218
  %v298 = vmul.f32 %v135, %v218
  %v299 = vmul.f32 %v130, %v222
  %v300 = vmul.f32 %v135, %v222
  %v301 = vmul.f32 %v130, %v226
  %v302 = vmul.f32 %v135, %v226
  %v303 = vmul.f32 %v140, %v214
  %v304 = vmul.f32 %v145, %v214
  %v305 = vmul.f32 %v140, %v218
  %v306 = vmul.f32 %v145, %v218
  %v307 = vmul.f32 %v140, %v222
  %v308 = vmul.f32 %v145, %v222
  %v309 = vmul.f32 %v140, %v226
  %v310 = vmul.f32 %v145, %v226
  %v311 = vmul.f32 %v150, %v214
  %v312 = vmul.f32 %v155, %v214
  %v313 = vmul.f32 %v150, %v218
  %v314 = vmul.f32 %v155, %v218
  %v315 = vmul.f32 %v150, %v222
  %v316 = vmul.f32 %v155, %v222
  %v317 = vmul.f32 %v150, %v226
  %v318 = vmul.f32 %v155, %v226
  %v319 = vmul.f32 %v160, %v214
  %v320 = vmul.f32 %v165, %v214
  %v321 = vmul.f32 %v160, %v218
  %v322 = vmul.f32 %v165, %v218
  %v323 = vmul.f32 %v160, %v222
  %v324 = vmul.f32 %v165, %v222
  %v325 = vmul.f32 %v160, %v226
  %v326 = vmul.f32 %v165, %v226
  %v327 = vmul.f32 %v170, %v214
  %v328 = vmul.f32 %v175, %v214
  %v329 = vmul.f32 %v170, %v218
  %v330 = vmul.f32 %v175, %v218
  %v331 = vmul.f32 %v170, %v222
  %v332 = vmul.f32 %v175, %v222
  %v333 = vmul.f32 %v170, %v226
  %v334 = vmul.f32 %v175, %v226
  %v335 = vmul.f32 %v180, %v214
  %v336 = vmul.f32 %v185, %v214
  %v337 = vmul.f32 %v180, %v218
  %v338 = vmul.f32 %v185, %v218
  %v339 = vmul.f32 %v180, %v222
  %v340 = vmul.f32 %v185, %v222
  %v341 = vmul.f32 %v180, %v226
  %v342 = vmul.f32 %v185, %v226
  %v343 = vmul.f32 %v190, %v214
  %v344 = vmul.f32 %v195, %v214
  %v345 = vmul.f32 %v190, %v218
  %v346 = vmul.f32 %v195, %v218
  %v347 = vmul.f32 %v190, %v222
  %v348 = vmul.f32 %v195, %v222
  %v349 = vmul.f32 %v190, %v226
  %v350 = vmul.f32 %v195, %v226
  %v351 = vmul.f32 %v200, %v214
  %v352 = vmul.f32 %v205, %v214
  %v353 = vmul.f32 %v200, %v218
  %v354 = vmul.f32 %v205, %v218
  %v355 = vmul.f32 %v200, %v222
  %v356 = vmul.f32 %v205, %v222
  %v357 = vmul.f32 %v200, %v226
  %v358 = vmul.f32 %v205, %v226
  %vm359 = vcmask 31744
  %360 = vst.msk [vmem:[%s2] sm:$0xff] %vm359, %v231
  %361 = vst.msk [vmem:[%s2 + $0x8] sm:$0xff] %vm359, %v232
  %362 = vst.msk [vmem:[%s2 + $0x10] sm:$0xff] %vm359, %v233
  %363 = vst.msk [vmem:[%s2 + $0x18] sm:$0xff] %vm359, %v234
  %364 = vst.msk [vmem:[%s2 + $0x20] sm:$0xff] %vm359, %v235
  %365 = vst.msk [vmem:[%s2 + $0x28] sm:$0xff] %vm359, %v236
  %366 = vst.msk [vmem:[%s2 + $0x30] sm:$0xff] %vm359, %v237
  %367 = vst.msk [vmem:[%s2 + $0x38] sm:$0xff] %vm359, %v238
  %368 = vst.msk [vmem:[%s2 + $0x40] sm:$0xff] %vm359, %v239
  %369 = vst.msk [vmem:[%s2 + $0x48] sm:$0xff] %vm359, %v240
  %370 = vst.msk [vmem:[%s2 + $0x50] sm:$0xff] %vm359, %v241
  %371 = vst.msk [vmem:[%s2 + $0x58] sm:$0xff] %vm359, %v242
  %372 = vst.msk [vmem:[%s2 + $0x60] sm:$0xff] %vm359, %v243
  %373 = vst.msk [vmem:[%s2 + $0x68] sm:$0xff] %vm359, %v244
  %374 = vst.msk [vmem:[%s2 + $0x70] sm:$0xff] %vm359, %v245
  %375 = vst.msk [vmem:[%s2 + $0x78] sm:$0xff] %vm359, %v246
  %376 = vst.msk [vmem:[%s2 + $0x80] sm:$0xff] %vm359, %v247
  %377 = vst.msk [vmem:[%s2 + $0x88] sm:$0xff] %vm359, %v248
  %378 = vst.msk [vmem:[%s2 + $0x90] sm:$0xff] %vm359, %v249
  %379 = vst.msk [vmem:[%s2 + $0x98] sm:$0xff] %vm359, %v250
  %380 = vst.msk [vmem:[%s2 + $0xa0] sm:$0xff] %vm359, %v251
  %381 = vst.msk [vmem:[%s2 + $0xa8] sm:$0xff] %vm359, %v252
  %382 = vst.msk [vmem:[%s2 + $0xb0] sm:$0xff] %vm359, %v253
  %383 = vst.msk [vmem:[%s2 + $0xb8] sm:$0xff] %vm359, %v254
  %384 = vst.msk [vmem:[%s2 + $0xc0] sm:$0xff] %vm359, %v255
  %385 = vst.msk [vmem:[%s2 + $0xc8] sm:$0xff] %vm359, %v256
  %386 = vst.msk [vmem:[%s2 + $0xd0] sm:$0xff] %vm359, %v257
  %387 = vst.msk [vmem:[%s2 + $0xd8] sm:$0xff] %vm359, %v258
  %388 = vst.msk [vmem:[%s2 + $0xe0] sm:$0xff] %vm359, %v259
  %389 = vst.msk [vmem:[%s2 + $0xe8] sm:$0xff] %vm359, %v260
  %390 = vst.msk [vmem:[%s2 + $0xf0] sm:$0xff] %vm359, %v261
  %391 = vst.msk [vmem:[%s2 + $0xf8] sm:$0xff] %vm359, %v262
  %392 = vst.msk [vmem:[%s2 + $0x100] sm:$0xff] %vm359, %v263
  %393 = vst.msk [vmem:[%s2 + $0x108] sm:$0xff] %vm359, %v264
  %394 = vst.msk [vmem:[%s2 + $0x110] sm:$0xff] %vm359, %v265
  %395 = vst.msk [vmem:[%s2 + $0x118] sm:$0xff] %vm359, %v266
  %396 = vst.msk [vmem:[%s2 + $0x120] sm:$0xff] %vm359, %v267
  %397 = vst.msk [vmem:[%s2 + $0x128] sm:$0xff] %vm359, %v268
  %398 = vst.msk [vmem:[%s2 + $0x130] sm:$0xff] %vm359, %v269
  %399 = vst.msk [vmem:[%s2 + $0x138] sm:$0xff] %vm359, %v270
  %400 = vst.msk [vmem:[%s2 + $0x140] sm:$0xff] %vm359, %v271
  %401 = vst.msk [vmem:[%s2 + $0x148] sm:$0xff] %vm359, %v272
  %402 = vst.msk [vmem:[%s2 + $0x150] sm:$0xff] %vm359, %v273
  %403 = vst.msk [vmem:[%s2 + $0x158] sm:$0xff] %vm359, %v274
  %404 = vst.msk [vmem:[%s2 + $0x160] sm:$0xff] %vm359, %v275
  %405 = vst.msk [vmem:[%s2 + $0x168] sm:$0xff] %vm359, %v276
  %406 = vst.msk [vmem:[%s2 + $0x170] sm:$0xff] %vm359, %v277
  %407 = vst.msk [vmem:[%s2 + $0x178] sm:$0xff] %vm359, %v278
  %408 = vst.msk [vmem:[%s2 + $0x180] sm:$0xff] %vm359, %v279
  %409 = vst.msk [vmem:[%s2 + $0x188] sm:$0xff] %vm359, %v280
  %410 = vst.msk [vmem:[%s2 + $0x190] sm:$0xff] %vm359, %v281
  %411 = vst.msk [vmem:[%s2 + $0x198] sm:$0xff] %vm359, %v282
  %412 = vst.msk [vmem:[%s2 + $0x1a0] sm:$0xff] %vm359, %v283
  %413 = vst.msk [vmem:[%s2 + $0x1a8] sm:$0xff] %vm359, %v284
  %414 = vst.msk [vmem:[%s2 + $0x1b0] sm:$0xff] %vm359, %v285
  %415 = vst.msk [vmem:[%s2 + $0x1b8] sm:$0xff] %vm359, %v286
  %416 = vst.msk [vmem:[%s2 + $0x1c0] sm:$0xff] %vm359, %v287
  %417 = vst.msk [vmem:[%s2 + $0x1c8] sm:$0xff] %vm359, %v288
  %418 = vst.msk [vmem:[%s2 + $0x1d0] sm:$0xff] %vm359, %v289
  %419 = vst.msk [vmem:[%s2 + $0x1d8] sm:$0xff] %vm359, %v290
  %420 = vst.msk [vmem:[%s2 + $0x1e0] sm:$0xff] %vm359, %v291
  %421 = vst.msk [vmem:[%s2 + $0x1e8] sm:$0xff] %vm359, %v292
  %422 = vst.msk [vmem:[%s2 + $0x1f0] sm:$0xff] %vm359, %v293
  %423 = vst.msk [vmem:[%s2 + $0x1f8] sm:$0xff] %vm359, %v294
  %424 = vst.msk [vmem:[%s2 + $0x200] sm:$0xff] %vm359, %v295
  %425 = vst.msk [vmem:[%s2 + $0x208] sm:$0xff] %vm359, %v296
  %426 = vst.msk [vmem:[%s2 + $0x210] sm:$0xff] %vm359, %v297
  %427 = vst.msk [vmem:[%s2 + $0x218] sm:$0xff] %vm359, %v298
  %428 = vst.msk [vmem:[%s2 + $0x220] sm:$0xff] %vm359, %v299
  %429 = vst.msk [vmem:[%s2 + $0x228] sm:$0xff] %vm359, %v300
  %430 = vst.msk [vmem:[%s2 + $0x230] sm:$0xff] %vm359, %v301
  %431 = vst.msk [vmem:[%s2 + $0x238] sm:$0xff] %vm359, %v302
  %432 = vst.msk [vmem:[%s2 + $0x240] sm:$0xff] %vm359, %v303
  %433 = vst.msk [vmem:[%s2 + $0x248] sm:$0xff] %vm359, %v304
  %434 = vst.msk [vmem:[%s2 + $0x250] sm:$0xff] %vm359, %v305
  %435 = vst.msk [vmem:[%s2 + $0x258] sm:$0xff] %vm359, %v306
  %436 = vst.msk [vmem:[%s2 + $0x260] sm:$0xff] %vm359, %v307
  %437 = vst.msk [vmem:[%s2 + $0x268] sm:$0xff] %vm359, %v308
  %438 = vst.msk [vmem:[%s2 + $0x270] sm:$0xff] %vm359, %v309
  %439 = vst.msk [vmem:[%s2 + $0x278] sm:$0xff] %vm359, %v310
  %440 = vst.msk [vmem:[%s2 + $0x280] sm:$0xff] %vm359, %v311
  %441 = vst.msk [vmem:[%s2 + $0x288] sm:$0xff] %vm359, %v312
  %442 = vst.msk [vmem:[%s2 + $0x290] sm:$0xff] %vm359, %v313
  %443 = vst.msk [vmem:[%s2 + $0x298] sm:$0xff] %vm359, %v314
  %444 = vst.msk [vmem:[%s2 + $0x2a0] sm:$0xff] %vm359, %v315
  %445 = vst.msk [vmem:[%s2 + $0x2a8] sm:$0xff] %vm359, %v316
  %446 = vst.msk [vmem:[%s2 + $0x2b0] sm:$0xff] %vm359, %v317
  %447 = vst.msk [vmem:[%s2 + $0x2b8] sm:$0xff] %vm359, %v318
  %448 = vst.msk [vmem:[%s2 + $0x2c0] sm:$0xff] %vm359, %v319
  %449 = vst.msk [vmem:[%s2 + $0x2c8] sm:$0xff] %vm359, %v320
  %450 = vst.msk [vmem:[%s2 + $0x2d0] sm:$0xff] %vm359, %v321
  %451 = vst.msk [vmem:[%s2 + $0x2d8] sm:$0xff] %vm359, %v322
  %452 = vst.msk [vmem:[%s2 + $0x2e0] sm:$0xff] %vm359, %v323
  %453 = vst.msk [vmem:[%s2 + $0x2e8] sm:$0xff] %vm359, %v324
  %454 = vst.msk [vmem:[%s2 + $0x2f0] sm:$0xff] %vm359, %v325
  %455 = vst.msk [vmem:[%s2 + $0x2f8] sm:$0xff] %vm359, %v326
  %456 = vst.msk [vmem:[%s2 + $0x300] sm:$0xff] %vm359, %v327
  %457 = vst.msk [vmem:[%s2 + $0x308] sm:$0xff] %vm359, %v328
  %458 = vst.msk [vmem:[%s2 + $0x310] sm:$0xff] %vm359, %v329
  %459 = vst.msk [vmem:[%s2 + $0x318] sm:$0xff] %vm359, %v330
  %460 = vst.msk [vmem:[%s2 + $0x320] sm:$0xff] %vm359, %v331
  %461 = vst.msk [vmem:[%s2 + $0x328] sm:$0xff] %vm359, %v332
  %462 = vst.msk [vmem:[%s2 + $0x330] sm:$0xff] %vm359, %v333
  %463 = vst.msk [vmem:[%s2 + $0x338] sm:$0xff] %vm359, %v334
  %464 = vst.msk [vmem:[%s2 + $0x340] sm:$0xff] %vm359, %v335
  %465 = vst.msk [vmem:[%s2 + $0x348] sm:$0xff] %vm359, %v336
  %466 = vst.msk [vmem:[%s2 + $0x350] sm:$0xff] %vm359, %v337
  %467 = vst.msk [vmem:[%s2 + $0x358] sm:$0xff] %vm359, %v338
  %468 = vst.msk [vmem:[%s2 + $0x360] sm:$0xff] %vm359, %v339
  %469 = vst.msk [vmem:[%s2 + $0x368] sm:$0xff] %vm359, %v340
  %470 = vst.msk [vmem:[%s2 + $0x370] sm:$0xff] %vm359, %v341
  %471 = vst.msk [vmem:[%s2 + $0x378] sm:$0xff] %vm359, %v342
  %472 = vst.msk [vmem:[%s2 + $0x380] sm:$0xff] %vm359, %v343
  %473 = vst.msk [vmem:[%s2 + $0x388] sm:$0xff] %vm359, %v344
  %474 = vst.msk [vmem:[%s2 + $0x390] sm:$0xff] %vm359, %v345
  %475 = vst.msk [vmem:[%s2 + $0x398] sm:$0xff] %vm359, %v346
  %476 = vst.msk [vmem:[%s2 + $0x3a0] sm:$0xff] %vm359, %v347
  %477 = vst.msk [vmem:[%s2 + $0x3a8] sm:$0xff] %vm359, %v348
  %478 = vst.msk [vmem:[%s2 + $0x3b0] sm:$0xff] %vm359, %v349
  %479 = vst.msk [vmem:[%s2 + $0x3b8] sm:$0xff] %vm359, %v350
  %480 = vst.msk [vmem:[%s2 + $0x3c0] sm:$0xff] %vm359, %v351
  %481 = vst.msk [vmem:[%s2 + $0x3c8] sm:$0xff] %vm359, %v352
  %482 = vst.msk [vmem:[%s2 + $0x3d0] sm:$0xff] %vm359, %v353
  %483 = vst.msk [vmem:[%s2 + $0x3d8] sm:$0xff] %vm359, %v354
  %484 = vst.msk [vmem:[%s2 + $0x3e0] sm:$0xff] %vm359, %v355
  %485 = vst.msk [vmem:[%s2 + $0x3e8] sm:$0xff] %vm359, %v356
  %486 = vst.msk [vmem:[%s2 + $0x3f0] sm:$0xff] %vm359, %v357
  %487 = vst.msk [vmem:[%s2 + $0x3f8] sm:$0xff] %vm359, %v358
  // Predicated region
  $region10: #{unitary_riemann_forward.1} parent=0 // pred_check
    _
  $region11: #{unitary_riemann_forward.1} parent=0 // pred_check_branch
    %489 = sbr.rel (0) target = $region13
  $region12: #{unitary_riemann_forward.1} parent=0 // pred_region
    _
  $region13: #{unitary_riemann_forward.1} parent=0 // pred_fallthru
    _
  // Predicated region
  $region14: #{unitary_riemann_forward.1} parent=0 // pred_check
    _
  $region15: #{unitary_riemann_forward.1} parent=0 // pred_check_branch
    %491 = sbr.rel (0) target = $region17
  $region16: #{unitary_riemann_forward.1} parent=0 // pred_region
    _
  $region17: #{unitary_riemann_forward.1} parent=0 // pred_fallthru
    _

</llo_original>
